<compile_context>
chip_gen: v5e
topology: v5e:2x2
jax: 0.10.0
libtpu: 0.0.40
codegen_flags: <defaults>
</compile_context>

<pallas_src>
import functools

import jax
import jax.numpy as jnp
from jax.experimental import pallas as pl
from jax.experimental.pallas import tpu as pltpu


# ----------------------------------------------------------------------------
# Pallas kernel: full VAE forward (encoder + reparameterize + decoder)
# ----------------------------------------------------------------------------
def _vae_kernel(
    x_ref, eps_ref,
    w1e_ref, b1e_ref, w2e_ref, b2e_ref, w3e_ref, b3e_ref,
    w1d_ref, b1d_ref, w2d_ref, b2d_ref, w3d_ref, b3d_ref,
    out_ref,
):
    in_size = w3d_ref.shape[1]
    dim = w1d_ref.shape[0]
    out_w = out_ref.shape[1]
    pad = out_w - (in_size + 2 * dim)
    tb = x_ref.shape[0]

    def linear(h, w_ref, b_ref):
        # h: (tb, in) f32; w_ref: (in, out) f32; b_ref: (1, out) f32.
        # MXU matmul with f32 accumulation; bias add on the VPU in f32.
        return (
            jnp.dot(h, w_ref[...], preferred_element_type=jnp.float32)
            + b_ref[...]
        )

    def elu(v):
        # nn.ELU(alpha=1.0). Clamp the exp argument so the positive branch
        # never transiently produces inf.
        # TODO(synk): switch to jnp.expm1 for extra precision near 0 once
        # guaranteed by the Mosaic lowering; forward-pass impact is ~ulp.
        return jnp.where(v > 0.0, v, jnp.exp(jnp.minimum(v, 0.0)) - 1.0)

    x = x_ref[...]

    # ---------------- encoder ----------------
    h1 = elu(linear(x, w1e_ref, b1e_ref))
    h2 = elu(linear(h1, w2e_ref, b2e_ref))
    h3 = linear(h2, w3e_ref, b3e_ref)          # (tb, 2*dim) = [mu | log_var]
    mu = h3[:, :dim]
    log_var = h3[:, dim:]

    # ---------------- reparameterize ----------------
    std = jnp.exp(0.5 * log_var)
    z = mu + eps_ref[...] * std

    # ---------------- decoder ----------------
    h4 = elu(linear(z, w1d_ref, b1d_ref))
    h5 = elu(linear(h4, w2d_ref, b2d_ref))
    dec = jnp.maximum(linear(h5, w3d_ref, b3d_ref), 0.0)   # ReLU

    # Lane-dense packed output row: [decoder_out | mu | log_var | 0-pad].
    # Concatenate in-register (XLU) and do ONE unmasked full-width store.
    parts = [dec, h3]
    if pad > 0:
        parts.append(jnp.zeros((tb, pad), jnp.float32))
    out_ref[...] = jnp.concatenate(parts, axis=-1)


# ----------------------------------------------------------------------------
# Parameter init (deterministic synthetic weights, PyTorch-Linear-like scale)
# ----------------------------------------------------------------------------
def init_vae_params(key, in_size, dim=10, hid_dim=20, dtype=jnp.float32):
    """Weights are stored PRE-TRANSPOSED as (in_features, out_features) so the
    kernel computes h @ W + b (== PyTorch x @ W^T + b). Biases are (1, out)."""
    layer_defs = {
        "1e": (in_size, hid_dim),
        "2e": (hid_dim, hid_dim),
        "3e": (hid_dim, 2 * dim),
        "1d": (dim, hid_dim),
        "2d": (hid_dim, hid_dim),
        "3d": (hid_dim, in_size),
    }
    params = {}
    keys = jax.random.split(key, 2 * len(layer_defs))
    for i, (name, (fan_in, fan_out)) in enumerate(sorted(layer_defs.items())):
        bound = 1.0 / (fan_in ** 0.5)
        params["w" + name] = jax.random.uniform(
            keys[2 * i], (fan_in, fan_out), dtype=dtype,
            minval=-bound, maxval=bound)
        params["b" + name] = jax.random.uniform(
            keys[2 * i + 1], (1, fan_out), dtype=dtype,
            minval=-bound, maxval=bound)
    return params


# ----------------------------------------------------------------------------
# Wrapper
# ----------------------------------------------------------------------------
def _round_up(n, m):
    return (n + m - 1) // m * m


_TB_MAX = 4096   # rows per grid step; ~5.4 MiB double-buffered VMEM at this size.


def _choose_tiling(B):
    """Pick (tb, Bp): big tiles to amortize per-step overhead, but keep an even
    number of grid steps >= 2 (when the batch allows) for dual-TC sharding on v7x."""
    Bp8 = _round_up(max(B, 1), 8)
    n = pl.cdiv(Bp8, _TB_MAX)
    if Bp8 > 8:
        n = max(n, 2)            # >= 2 steps so "parallel" can use both TCs
        n = _round_up(n, 2)      # even step count splits evenly across 2 TCs
    tb = _round_up(pl.cdiv(Bp8, n), 8)
    return tb, n * tb


@functools.partial(jax.jit, static_argnames=("dim",))
def vae_forward_once(x, eps, params, dim=10):
    """Encoder + reparameterize + decoder in one Pallas call.
    Returns (decoder_out, mu, log_var)."""
    B, in_size = x.shape
    hid_dim = params["w1e"].shape[1]
    out_w = _round_up(in_size + 2 * dim, 128)   # lane-dense packed output width

    # --- batch tiling --------------------------------------------------------
    tb, Bp = _choose_tiling(B)
    if Bp != B:
        x = jnp.pad(x, ((0, Bp - B), (0, 0)))
        eps = jnp.pad(eps, ((0, Bp - B), (0, 0)))
    grid = (Bp // tb,)

    f32 = lambda a: a.astype(jnp.float32)
    weights = (
        f32(params["w1e"]), f32(params["b1e"]),
        f32(params["w2e"]), f32(params["b2e"]),
        f32(params["w3e"]), f32(params["b3e"]),
        f32(params["w1d"]), f32(params["b1d"]),
        f32(params["w2d"]), f32(params["b2d"]),
        f32(params["w3d"]), f32(params["b3d"]),
    )

    def batch_spec(width):
        return pl.BlockSpec((tb, width), lambda i: (i, 0))

    def const_spec(a):
        # Full-array block with constant index_map -> stays VMEM resident
        # across all batch grid steps.
        return pl.BlockSpec(a.shape, lambda i: (0, 0))

    in_specs = ([batch_spec(in_size), batch_spec(dim)]
                + [const_spec(w) for w in weights])
    out_specs = pl.BlockSpec((tb, out_w), lambda i: (i, 0))

    # Advisory cost estimate so XLA schedules/overlaps this small call.
    flops = 2 * Bp * (in_size * hid_dim + hid_dim * hid_dim
                      + hid_dim * 2 * dim + dim * hid_dim
                      + hid_dim * hid_dim + hid_dim * in_size)
    transcendentals = Bp * (4 * hid_dim + dim)   # 4 ELU layers + exp(0.5*lv)
    bytes_accessed = int(
        x.size * x.dtype.itemsize + eps.size * eps.dtype.itemsize
        + sum(w.size * w.dtype.itemsize for w in weights)
        + Bp * out_w * 4)

    packed = pl.pallas_call(
        _vae_kernel,
        grid=grid,
        out_shape=jax.ShapeDtypeStruct((Bp, out_w), jnp.float32),
        in_specs=in_specs,
        out_specs=out_specs,
        compiler_params=pltpu.CompilerParams(
            dimension_semantics=("parallel",)),   # dual-TC sharding on v7x
        cost_estimate=pl.CostEstimate(
            flops=int(flops),
            transcendentals=int(transcendentals),
            bytes_accessed=bytes_accessed),
    )(x, eps, *weights)

    dec = packed[:B, :in_size]
    mu = packed[:B, in_size:in_size + dim]
    log_var = packed[:B, in_size + dim:in_size + 2 * dim]
    return dec, mu, log_var


def vae_forward(x, eps, params, m, dim=10):
    """Reproduces VAE.forward(x_input, m) -> (prob_list, mu_list, log_var_list).

    The PyTorch loop reuses the same z for all m iterations, so every entry
    of prob_list is identical; compute once and replicate."""
    out, mu, log_var = vae_forward_once(x, eps, params, dim=dim)
    prob_list = [out for _ in range(m)]
    mu_list = [mu for _ in range(m)]
    log_var_list = [log_var for _ in range(m)]
    return prob_list, mu_list, log_var_list


# ----------------------------------------------------------------------------
# Pure-JAX reference for sanity checking
# ----------------------------------------------------------------------------
def _reference(x, eps, params, dim=10):
    elu = lambda v: jnp.where(v > 0, v, jnp.exp(v) - 1.0)
    lin = lambda h, w, b: h @ w + b
    h1 = elu(lin(x, params["w1e"], params["b1e"]))
    h2 = elu(lin(h1, params["w2e"], params["b2e"]))
    h3 = lin(h2, params["w3e"], params["b3e"])
    mu, log_var = h3[:, :dim], h3[:, dim:]
    z = mu + eps * jnp.exp(0.5 * log_var)
    h4 = elu(lin(z, params["w1d"], params["b1d"]))
    h5 = elu(lin(h4, params["w2d"], params["b2d"]))
    out = jnp.maximum(lin(h5, params["w3d"], params["b3d"]), 0.0)
    return out, mu, log_var


if __name__ == "__main__":
    B, in_size, dim, m = 8, 32, 10, 3

    key = jax.random.PRNGKey(0)
    k_param, k_x, k_eps, k_x2, k_eps2 = jax.random.split(key, 5)

    params = init_vae_params(k_param, in_size=in_size, dim=dim)
    x = jax.random.normal(k_x, (B, in_size), dtype=jnp.float32)
    # eps plays the role of torch.randn_like(std) in reparameterize().
    eps = jax.random.normal(k_eps, (B, dim), dtype=jnp.float32)

    # ---------------- small batch (single grid step) -------------------------
    prob_list, mu_list, log_var_list = vae_forward(x, eps, params, m, dim=dim)
    jax.block_until_ready(prob_list[0])
    jax.block_until_ready(mu_list[0])
    jax.block_until_ready(log_var_list[0])

    ref_out, ref_mu, ref_lv = _reference(x, eps, params, dim=dim)
    assert len(prob_list) == m and len(mu_list) == m and len(log_var_list) == m
    assert prob_list[0].shape == (B, in_size)
    assert mu_list[0].shape == (B, dim) and log_var_list[0].shape == (B, dim)
    assert jnp.allclose(prob_list[0], ref_out, atol=1e-4, rtol=1e-4)
    assert jnp.allclose(mu_list[0], ref_mu, atol=1e-4, rtol=1e-4)
    assert jnp.allclose(log_var_list[0], ref_lv, atol=1e-4, rtol=1e-4)

    # -------- larger, non-block-multiple batch (2-step parallel grid) --------
    B2 = 200
    x2 = jax.random.normal(k_x2, (B2, in_size), dtype=jnp.float32)
    eps2 = jax.random.normal(k_eps2, (B2, dim), dtype=jnp.float32)
    out2, mu2, lv2 = vae_forward_once(x2, eps2, params, dim=dim)
    jax.block_until_ready(out2)
    r_out2, r_mu2, r_lv2 = _reference(x2, eps2, params, dim=dim)
    assert out2.shape == (B2, in_size) and mu2.shape == (B2, dim)
    assert jnp.allclose(out2, r_out2, atol=1e-4, rtol=1e-4)
    assert jnp.allclose(mu2, r_mu2, atol=1e-4, rtol=1e-4)
    assert jnp.allclose(lv2, r_lv2, atol=1e-4, rtol=1e-4)

    print("KERNEL_OK")
</pallas_src>

<mosaic_0001>
module attributes {stable_mosaic.version = 11 : i64} {
  func.func @_vae_kernel(%arg0: i32, %arg1: memref<8x32xf32, #tpu.memory_space<vmem>>, %arg2: memref<8x10xf32, #tpu.memory_space<vmem>>, %arg3: memref<32x20xf32, #tpu.memory_space<vmem>>, %arg4: memref<1x20xf32, #tpu.memory_space<vmem>>, %arg5: memref<20x20xf32, #tpu.memory_space<vmem>>, %arg6: memref<1x20xf32, #tpu.memory_space<vmem>>, %arg7: memref<20x20xf32, #tpu.memory_space<vmem>>, %arg8: memref<1x20xf32, #tpu.memory_space<vmem>>, %arg9: memref<10x20xf32, #tpu.memory_space<vmem>>, %arg10: memref<1x20xf32, #tpu.memory_space<vmem>>, %arg11: memref<20x20xf32, #tpu.memory_space<vmem>>, %arg12: memref<1x20xf32, #tpu.memory_space<vmem>>, %arg13: memref<20x32xf32, #tpu.memory_space<vmem>>, %arg14: memref<1x32xf32, #tpu.memory_space<vmem>>, %arg15: memref<8x128xf32, #tpu.memory_space<vmem>>) attributes {dimension_semantics = [#tpu.dimension_semantics<parallel>], iteration_bounds = array<i64: 1>, scalar_prefetch = 0 : i64, scratch_operands = 0 : i64, tpu.core_type = #tpu.core_type<tc>, window_params = [{transform_indices = @transform_0, window_bounds = array<i64: 8, 32>}, {transform_indices = @transform_1, window_bounds = array<i64: 8, 10>}, {pipeline_mode = #tpu.pipeline_mode<synchronous>, transform_indices = @transform_2, window_bounds = array<i64: 32, 20>}, {pipeline_mode = #tpu.pipeline_mode<synchronous>, transform_indices = @transform_3, window_bounds = array<i64: 1, 20>}, {pipeline_mode = #tpu.pipeline_mode<synchronous>, transform_indices = @transform_4, window_bounds = array<i64: 20, 20>}, {pipeline_mode = #tpu.pipeline_mode<synchronous>, transform_indices = @transform_5, window_bounds = array<i64: 1, 20>}, {pipeline_mode = #tpu.pipeline_mode<synchronous>, transform_indices = @transform_6, window_bounds = array<i64: 20, 20>}, {pipeline_mode = #tpu.pipeline_mode<synchronous>, transform_indices = @transform_7, window_bounds = array<i64: 1, 20>}, {pipeline_mode = #tpu.pipeline_mode<synchronous>, transform_indices = @transform_8, window_bounds = array<i64: 10, 20>}, {pipeline_mode = #tpu.pipeline_mode<synchronous>, transform_indices = @transform_9, window_bounds = array<i64: 1, 20>}, {pipeline_mode = #tpu.pipeline_mode<synchronous>, transform_indices = @transform_10, window_bounds = array<i64: 20, 20>}, {pipeline_mode = #tpu.pipeline_mode<synchronous>, transform_indices = @transform_11, window_bounds = array<i64: 1, 20>}, {pipeline_mode = #tpu.pipeline_mode<synchronous>, transform_indices = @transform_12, window_bounds = array<i64: 20, 32>}, {pipeline_mode = #tpu.pipeline_mode<synchronous>, transform_indices = @transform_13, window_bounds = array<i64: 1, 32>}, {transform_indices = @transform_14, window_bounds = array<i64: 8, 128>}]} {
    %c0 = arith.constant 0 : index
    %c0_0 = arith.constant 0 : index
    %0 = vector.load %arg1[%c0, %c0_0] : memref<8x32xf32, #tpu.memory_space<vmem>>, vector<8x32xf32>
    %c0_1 = arith.constant 0 : index
    %c0_2 = arith.constant 0 : index
    %1 = vector.load %arg3[%c0_1, %c0_2] : memref<32x20xf32, #tpu.memory_space<vmem>>, vector<32x20xf32>
    %cst = arith.constant dense<0.000000e+00> : vector<8x20xf32>
    %2 = tpu.matmul %0, %1, %cst {dimension_numbers = #tpu.dot_dimension_numbers<[1], [0], [0], [1], [0, 0, 1, 1], [], []>} : vector<8x32xf32>, vector<32x20xf32>, vector<8x20xf32> -> vector<8x20xf32>
    %c0_3 = arith.constant 0 : index
    %c0_4 = arith.constant 0 : index
    %3 = vector.load %arg4[%c0_3, %c0_4] : memref<1x20xf32, #tpu.memory_space<vmem>>, vector<1x20xf32>
    %4 = vector.broadcast %3 : vector<1x20xf32> to vector<8x20xf32>
    %5 = arith.addf %2, %4 : vector<8x20xf32>
    %cst_5 = arith.constant 0.000000e+00 : f32
    %6 = vector.broadcast %cst_5 : f32 to vector<8x20xf32>
    %7 = arith.cmpf ogt, %5, %6 : vector<8x20xf32>
    %cst_6 = arith.constant 0.000000e+00 : f32
    %8 = vector.broadcast %cst_6 : f32 to vector<8x20xf32>
    %9 = arith.minimumf %5, %8 : vector<8x20xf32>
    %10 = math.exp %9 : vector<8x20xf32>
    %cst_7 = arith.constant 1.000000e+00 : f32
    %11 = vector.broadcast %cst_7 : f32 to vector<8x20xf32>
    %12 = arith.subf %10, %11 : vector<8x20xf32>
    %13 = arith.select %7, %5, %12 : vector<8x20xi1>, vector<8x20xf32>
    %c0_8 = arith.constant 0 : index
    %c0_9 = arith.constant 0 : index
    %14 = vector.load %arg5[%c0_8, %c0_9] : memref<20x20xf32, #tpu.memory_space<vmem>>, vector<20x20xf32>
    %cst_10 = arith.constant dense<0.000000e+00> : vector<8x20xf32>
    %15 = tpu.matmul %13, %14, %cst_10 {dimension_numbers = #tpu.dot_dimension_numbers<[1], [0], [0], [1], [0, 0, 1, 1], [], []>} : vector<8x20xf32>, vector<20x20xf32>, vector<8x20xf32> -> vector<8x20xf32>
    %c0_11 = arith.constant 0 : index
    %c0_12 = arith.constant 0 : index
    %16 = vector.load %arg6[%c0_11, %c0_12] : memref<1x20xf32, #tpu.memory_space<vmem>>, vector<1x20xf32>
    %17 = vector.broadcast %16 : vector<1x20xf32> to vector<8x20xf32>
    %18 = arith.addf %15, %17 : vector<8x20xf32>
    %cst_13 = arith.constant 0.000000e+00 : f32
    %19 = vector.broadcast %cst_13 : f32 to vector<8x20xf32>
    %20 = arith.cmpf ogt, %18, %19 : vector<8x20xf32>
    %cst_14 = arith.constant 0.000000e+00 : f32
    %21 = vector.broadcast %cst_14 : f32 to vector<8x20xf32>
    %22 = arith.minimumf %18, %21 : vector<8x20xf32>
    %23 = math.exp %22 : vector<8x20xf32>
    %cst_15 = arith.constant 1.000000e+00 : f32
    %24 = vector.broadcast %cst_15 : f32 to vector<8x20xf32>
    %25 = arith.subf %23, %24 : vector<8x20xf32>
    %26 = arith.select %20, %18, %25 : vector<8x20xi1>, vector<8x20xf32>
    %c0_16 = arith.constant 0 : index
    %c0_17 = arith.constant 0 : index
    %27 = vector.load %arg7[%c0_16, %c0_17] : memref<20x20xf32, #tpu.memory_space<vmem>>, vector<20x20xf32>
    %cst_18 = arith.constant dense<0.000000e+00> : vector<8x20xf32>
    %28 = tpu.matmul %26, %27, %cst_18 {dimension_numbers = #tpu.dot_dimension_numbers<[1], [0], [0], [1], [0, 0, 1, 1], [], []>} : vector<8x20xf32>, vector<20x20xf32>, vector<8x20xf32> -> vector<8x20xf32>
    %c0_19 = arith.constant 0 : index
    %c0_20 = arith.constant 0 : index
    %29 = vector.load %arg8[%c0_19, %c0_20] : memref<1x20xf32, #tpu.memory_space<vmem>>, vector<1x20xf32>
    %30 = vector.broadcast %29 : vector<1x20xf32> to vector<8x20xf32>
    %31 = arith.addf %28, %30 : vector<8x20xf32>
    %32 = vector.extract_strided_slice %31 {offsets = [0, 0], sizes = [8, 10], strides = [1, 1]} : vector<8x20xf32> to vector<8x10xf32>
    %33 = vector.extract_strided_slice %31 {offsets = [0, 10], sizes = [8, 10], strides = [1, 1]} : vector<8x20xf32> to vector<8x10xf32>
    %cst_21 = arith.constant 5.000000e-01 : f32
    %34 = vector.broadcast %cst_21 : f32 to vector<8x10xf32>
    %35 = arith.mulf %34, %33 : vector<8x10xf32>
    %36 = math.exp %35 : vector<8x10xf32>
    %c0_22 = arith.constant 0 : index
    %c0_23 = arith.constant 0 : index
    %37 = vector.load %arg2[%c0_22, %c0_23] : memref<8x10xf32, #tpu.memory_space<vmem>>, vector<8x10xf32>
    %38 = arith.mulf %37, %36 : vector<8x10xf32>
    %39 = arith.addf %32, %38 : vector<8x10xf32>
    %c0_24 = arith.constant 0 : index
    %c0_25 = arith.constant 0 : index
    %40 = vector.load %arg9[%c0_24, %c0_25] : memref<10x20xf32, #tpu.memory_space<vmem>>, vector<10x20xf32>
    %cst_26 = arith.constant dense<0.000000e+00> : vector<8x20xf32>
    %41 = tpu.matmul %39, %40, %cst_26 {dimension_numbers = #tpu.dot_dimension_numbers<[1], [0], [0], [1], [0, 0, 1, 1], [], []>} : vector<8x10xf32>, vector<10x20xf32>, vector<8x20xf32> -> vector<8x20xf32>
    %c0_27 = arith.constant 0 : index
    %c0_28 = arith.constant 0 : index
    %42 = vector.load %arg10[%c0_27, %c0_28] : memref<1x20xf32, #tpu.memory_space<vmem>>, vector<1x20xf32>
    %43 = vector.broadcast %42 : vector<1x20xf32> to vector<8x20xf32>
    %44 = arith.addf %41, %43 : vector<8x20xf32>
    %cst_29 = arith.constant 0.000000e+00 : f32
    %45 = vector.broadcast %cst_29 : f32 to vector<8x20xf32>
    %46 = arith.cmpf ogt, %44, %45 : vector<8x20xf32>
    %cst_30 = arith.constant 0.000000e+00 : f32
    %47 = vector.broadcast %cst_30 : f32 to vector<8x20xf32>
    %48 = arith.minimumf %44, %47 : vector<8x20xf32>
    %49 = math.exp %48 : vector<8x20xf32>
    %cst_31 = arith.constant 1.000000e+00 : f32
    %50 = vector.broadcast %cst_31 : f32 to vector<8x20xf32>
    %51 = arith.subf %49, %50 : vector<8x20xf32>
    %52 = arith.select %46, %44, %51 : vector<8x20xi1>, vector<8x20xf32>
    %c0_32 = arith.constant 0 : index
    %c0_33 = arith.constant 0 : index
    %53 = vector.load %arg11[%c0_32, %c0_33] : memref<20x20xf32, #tpu.memory_space<vmem>>, vector<20x20xf32>
    %cst_34 = arith.constant dense<0.000000e+00> : vector<8x20xf32>
    %54 = tpu.matmul %52, %53, %cst_34 {dimension_numbers = #tpu.dot_dimension_numbers<[1], [0], [0], [1], [0, 0, 1, 1], [], []>} : vector<8x20xf32>, vector<20x20xf32>, vector<8x20xf32> -> vector<8x20xf32>
    %c0_35 = arith.constant 0 : index
    %c0_36 = arith.constant 0 : index
    %55 = vector.load %arg12[%c0_35, %c0_36] : memref<1x20xf32, #tpu.memory_space<vmem>>, vector<1x20xf32>
    %56 = vector.broadcast %55 : vector<1x20xf32> to vector<8x20xf32>
    %57 = arith.addf %54, %56 : vector<8x20xf32>
    %cst_37 = arith.constant 0.000000e+00 : f32
    %58 = vector.broadcast %cst_37 : f32 to vector<8x20xf32>
    %59 = arith.cmpf ogt, %57, %58 : vector<8x20xf32>
    %cst_38 = arith.constant 0.000000e+00 : f32
    %60 = vector.broadcast %cst_38 : f32 to vector<8x20xf32>
    %61 = arith.minimumf %57, %60 : vector<8x20xf32>
    %62 = math.exp %61 : vector<8x20xf32>
    %cst_39 = arith.constant 1.000000e+00 : f32
    %63 = vector.broadcast %cst_39 : f32 to vector<8x20xf32>
    %64 = arith.subf %62, %63 : vector<8x20xf32>
    %65 = arith.select %59, %57, %64 : vector<8x20xi1>, vector<8x20xf32>
    %c0_40 = arith.constant 0 : index
    %c0_41 = arith.constant 0 : index
    %66 = vector.load %arg13[%c0_40, %c0_41] : memref<20x32xf32, #tpu.memory_space<vmem>>, vector<20x32xf32>
    %cst_42 = arith.constant dense<0.000000e+00> : vector<8x32xf32>
    %67 = tpu.matmul %65, %66, %cst_42 {dimension_numbers = #tpu.dot_dimension_numbers<[1], [0], [0], [1], [0, 0, 1, 1], [], []>} : vector<8x20xf32>, vector<20x32xf32>, vector<8x32xf32> -> vector<8x32xf32>
    %c0_43 = arith.constant 0 : index
    %c0_44 = arith.constant 0 : index
    %68 = vector.load %arg14[%c0_43, %c0_44] : memref<1x32xf32, #tpu.memory_space<vmem>>, vector<1x32xf32>
    %69 = vector.broadcast %68 : vector<1x32xf32> to vector<8x32xf32>
    %70 = arith.addf %67, %69 : vector<8x32xf32>
    %cst_45 = arith.constant 0.000000e+00 : f32
    %71 = vector.broadcast %cst_45 : f32 to vector<8x32xf32>
    %72 = arith.maximumf %70, %71 : vector<8x32xf32>
    %cst_46 = arith.constant 0.000000e+00 : f32
    %73 = vector.broadcast %cst_46 : f32 to vector<8x76xf32>
    %74 = tpu.concatenate %72, %31, %73 in 1 : vector<8x32xf32>, vector<8x20xf32>, vector<8x76xf32> -> vector<8x128xf32>
    %c0_47 = arith.constant 0 : index
    %c0_48 = arith.constant 0 : index
    %75 = vector.load %arg15[%c0_47, %c0_48] : memref<8x128xf32, #tpu.memory_space<vmem>>, vector<8x128xf32>
    tpu.vector_store %arg15[%c0_47, %c0_48], %74 {strides = array<i32>} : memref<8x128xf32, #tpu.memory_space<vmem>>, vector<8x128xf32>,
    return
  }
  func.func @transform_0(%arg0: i32) -> (i32, i32) {
    %c0_i32 = arith.constant 0 : i32
    %c0_i32_0 = arith.constant 0 : i32
    return %arg0, %c0_i32 : i32, i32
  }
  func.func @transform_1(%arg0: i32) -> (i32, i32) {
    %c0_i32 = arith.constant 0 : i32
    %c0_i32_0 = arith.constant 0 : i32
    return %arg0, %c0_i32 : i32, i32
  }
  func.func @transform_2(%arg0: i32) -> (i32, i32) {
    %c0_i32 = arith.constant 0 : i32
    %c0_i32_0 = arith.constant 0 : i32
    %c0_i32_1 = arith.constant 0 : i32
    return %c0_i32, %c0_i32_0 : i32, i32
  }
  func.func @transform_3(%arg0: i32) -> (i32, i32) {
    %c0_i32 = arith.constant 0 : i32
    %c0_i32_0 = arith.constant 0 : i32
    %c0_i32_1 = arith.constant 0 : i32
    return %c0_i32, %c0_i32_0 : i32, i32
  }
  func.func @transform_4(%arg0: i32) -> (i32, i32) {
    %c0_i32 = arith.constant 0 : i32
    %c0_i32_0 = arith.constant 0 : i32
    %c0_i32_1 = arith.constant 0 : i32
    return %c0_i32, %c0_i32_0 : i32, i32
  }
  func.func @transform_5(%arg0: i32) -> (i32, i32) {
    %c0_i32 = arith.constant 0 : i32
    %c0_i32_0 = arith.constant 0 : i32
    %c0_i32_1 = arith.constant 0 : i32
    return %c0_i32, %c0_i32_0 : i32, i32
  }
  func.func @transform_6(%arg0: i32) -> (i32, i32) {
    %c0_i32 = arith.constant 0 : i32
    %c0_i32_0 = arith.constant 0 : i32
    %c0_i32_1 = arith.constant 0 : i32
    return %c0_i32, %c0_i32_0 : i32, i32
  }
  func.func @transform_7(%arg0: i32) -> (i32, i32) {
    %c0_i32 = arith.constant 0 : i32
    %c0_i32_0 = arith.constant 0 : i32
    %c0_i32_1 = arith.constant 0 : i32
    return %c0_i32, %c0_i32_0 : i32, i32
  }
  func.func @transform_8(%arg0: i32) -> (i32, i32) {
    %c0_i32 = arith.constant 0 : i32
    %c0_i32_0 = arith.constant 0 : i32
    %c0_i32_1 = arith.constant 0 : i32
    return %c0_i32, %c0_i32_0 : i32, i32
  }
  func.func @transform_9(%arg0: i32) -> (i32, i32) {
    %c0_i32 = arith.constant 0 : i32
    %c0_i32_0 = arith.constant 0 : i32
    %c0_i32_1 = arith.constant 0 : i32
    return %c0_i32, %c0_i32_0 : i32, i32
  }
  func.func @transform_10(%arg0: i32) -> (i32, i32) {
    %c0_i32 = arith.constant 0 : i32
    %c0_i32_0 = arith.constant 0 : i32
    %c0_i32_1 = arith.constant 0 : i32
    return %c0_i32, %c0_i32_0 : i32, i32
  }
  func.func @transform_11(%arg0: i32) -> (i32, i32) {
    %c0_i32 = arith.constant 0 : i32
    %c0_i32_0 = arith.constant 0 : i32
    %c0_i32_1 = arith.constant 0 : i32
    return %c0_i32, %c0_i32_0 : i32, i32
  }
  func.func @transform_12(%arg0: i32) -> (i32, i32) {
    %c0_i32 = arith.constant 0 : i32
    %c0_i32_0 = arith.constant 0 : i32
    %c0_i32_1 = arith.constant 0 : i32
    return %c0_i32, %c0_i32_0 : i32, i32
  }
  func.func @transform_13(%arg0: i32) -> (i32, i32) {
    %c0_i32 = arith.constant 0 : i32
    %c0_i32_0 = arith.constant 0 : i32
    %c0_i32_1 = arith.constant 0 : i32
    return %c0_i32, %c0_i32_0 : i32, i32
  }
  func.func @transform_14(%arg0: i32) -> (i32, i32) {
    %c0_i32 = arith.constant 0 : i32
    %c0_i32_0 = arith.constant 0 : i32
    return %arg0, %c0_i32 : i32, i32
  }
}

</mosaic_0001>

<llo_original>
// kernel: vae_forward_once.1
$region0: #{vae_forward_once.1}
  #allocation0 [shape = 'u32[]', space=smem, size = 0x4, offset = 0x4, fixed_abs, tag = 'smem constant byte address 0x4 - core index']
  #allocation1 [shape = 'u32[72,128]{1,0:T(1,128)}', space=vmem, size = 0x9000, scoped, tag = 'internal scratch']
  %s0 = inlined_call_operand.vmem [shape: f32[8,32], index: 0, kind: input, shape index: {}]
  %s1 = inlined_call_operand.hbm [shape: f32[8,10], index: 1, kind: input, shape index: {}]
  %s2 = inlined_call_operand.vmem [shape: f32[32,20], index: 2, kind: input, shape index: {}]
  %s3 = inlined_call_operand.vmem [shape: f32[1,20], index: 3, kind: input, shape index: {}]
  %s4 = inlined_call_operand.vmem [shape: f32[20,20], index: 4, kind: input, shape index: {}]
  %s5 = inlined_call_operand.vmem [shape: f32[1,20], index: 5, kind: input, shape index: {}]
  %s6 = inlined_call_operand.vmem [shape: f32[20,20], index: 6, kind: input, shape index: {}]
  %s7 = inlined_call_operand.vmem [shape: f32[1,20], index: 7, kind: input, shape index: {}]
  %s8 = inlined_call_operand.hbm [shape: f32[10,20], index: 8, kind: input, shape index: {}]
  %s9 = inlined_call_operand.hbm [shape: f32[1,20], index: 9, kind: input, shape index: {}]
  %s10 = inlined_call_operand.hbm [shape: f32[20,20], index: 10, kind: input, shape index: {}]
  %s11 = inlined_call_operand.hbm [shape: f32[1,20], index: 11, kind: input, shape index: {}]
  %s12 = inlined_call_operand.hbm [shape: f32[20,32], index: 12, kind: input, shape index: {}]
  %s13 = inlined_call_operand.vmem [shape: f32[1,32], index: 13, kind: input, shape index: {}]
  %s14 = inlined_call_operand.vmem [shape: f32[8,128], index: 14, kind: output, shape index: {}]
  %s15 = sld [smem:[#allocation0]]
  $region90: #{vae_forward_once.1} parent=0
    _
  %s17 = ssub.s32 1, %s15
  %s18 = scalar_select 0, %s17, %s15
  $region1: #{vae_forward_once.1} parent=0
    #allocation2 [shape = 'u8[4096]{0}', space=vmem, size = 0x1000, scoped, tag = 'input window, operand 1, single buffered']
    #allocation3 [shape = 's32[1]{0}', space=sflag, size = 0x4, scoped, tag = 'scoped memory for vae_forward_once.1']
    #allocation4 [shape = 'u8[8192]{0}', space=vmem, size = 0x2000, scoped, tag = 'input window, operand 8, single buffered']
    #allocation5 [shape = 's32[1]{0}', space=sflag, size = 0x4, scoped, tag = 'scoped memory for vae_forward_once.1']
    #allocation6 [shape = 'u8[512]{0}', space=vmem, size = 0x400, scoped, tag = 'input window, operand 9, single buffered']
    #allocation7 [shape = 'u8[12288]{0}', space=vmem, size = 0x3000, scoped, tag = 'input window, operand 10, single buffered']
    #allocation8 [shape = 's32[1]{0}', space=sflag, size = 0x4, scoped, tag = 'scoped memory for vae_forward_once.1']
    #allocation9 [shape = 'u8[512]{0}', space=vmem, size = 0x400, scoped, tag = 'input window, operand 11, single buffered']
    #allocation10 [shape = 'u8[12288]{0}', space=vmem, size = 0x3000, scoped, tag = 'input window, operand 12, single buffered']
    #allocation11 [shape = 's32[1]{0}', space=sflag, size = 0x4, scoped, tag = 'scoped memory for vae_forward_once.1']
    %19 = vsyncpa [#allocation3], 0
    %20 = vsyncpa [#allocation5], 0
    %21 = vsyncpa [#allocation8], 0
    %22 = vsyncpa [#allocation11], 0
    // Predicated region
    $region2: #{vae_forward_once.1} parent=1 // pred_check
      _
    $region3: #{vae_forward_once.1} parent=1 // pred_check_branch
      %24 = sbr.rel (0) target = $region5
    $region4: #{vae_forward_once.1} parent=1 // pred_region
      _
    $region5: #{vae_forward_once.1} parent=1 // pred_fallthru
      _
    // Predicated region
    $region6: #{vae_forward_once.1} parent=1 // pred_check
      _
    $region7: #{vae_forward_once.1} parent=1 // pred_check_branch
      %26 = sbr.rel (0) target = $region9
    $region8: #{vae_forward_once.1} parent=1 // pred_region
      %28 = vsyncadd [#allocation3], 0
      %s30 = sshll.u32 %s1, 4
      %s31 = int_to_ptr.hbm [resolvable:$true] %s30
      %s32 = sshll.u32 [#allocation2], 4
      %s33 = int_to_ptr.vmem [resolvable:$true] %s32
      %35 = dma.hbm_to_vmem [thread:$0]  %s31, 128, %s33, [#allocation3]
    $region9: #{vae_forward_once.1} parent=1 // pred_fallthru
      _
    // Predicated region
    $region10: #{vae_forward_once.1} parent=1 // pred_check
      _
    $region11: #{vae_forward_once.1} parent=1 // pred_check_branch
      %37 = sbr.rel (0) target = $region13
    $region12: #{vae_forward_once.1} parent=1 // pred_region
      _
    $region13: #{vae_forward_once.1} parent=1 // pred_fallthru
      _
    // Predicated region
    $region14: #{vae_forward_once.1} parent=1 // pred_check
      _
    $region15: #{vae_forward_once.1} parent=1 // pred_check_branch
      %39 = sbr.rel (0) target = $region17
    $region16: #{vae_forward_once.1} parent=1 // pred_region
      _
    $region17: #{vae_forward_once.1} parent=1 // pred_fallthru
      _
    // Predicated region
    $region18: #{vae_forward_once.1} parent=1 // pred_check
      _
    $region19: #{vae_forward_once.1} parent=1 // pred_check_branch
      %41 = sbr.rel (0) target = $region21
    $region20: #{vae_forward_once.1} parent=1 // pred_region
      _
    $region21: #{vae_forward_once.1} parent=1 // pred_fallthru
      _
    // Predicated region
    $region22: #{vae_forward_once.1} parent=1 // pred_check
      _
    $region23: #{vae_forward_once.1} parent=1 // pred_check_branch
      %43 = sbr.rel (0) target = $region25
    $region24: #{vae_forward_once.1} parent=1 // pred_region
      _
    $region25: #{vae_forward_once.1} parent=1 // pred_fallthru
      _
    // Predicated region
    $region26: #{vae_forward_once.1} parent=1 // pred_check
      _
    $region27: #{vae_forward_once.1} parent=1 // pred_check_branch
      %45 = sbr.rel (0) target = $region29
    $region28: #{vae_forward_once.1} parent=1 // pred_region
      _
    $region29: #{vae_forward_once.1} parent=1 // pred_fallthru
      _
    // Predicated region
    $region30: #{vae_forward_once.1} parent=1 // pred_check
      _
    $region31: #{vae_forward_once.1} parent=1 // pred_check_branch
      %47 = sbr.rel (0) target = $region33
    $region32: #{vae_forward_once.1} parent=1 // pred_region
      _
    $region33: #{vae_forward_once.1} parent=1 // pred_fallthru
      _
    // Predicated region
    $region34: #{vae_forward_once.1} parent=1 // pred_check
      _
    $region35: #{vae_forward_once.1} parent=1 // pred_check_branch
      %49 = sbr.rel (0) target = $region37
    $region36: #{vae_forward_once.1} parent=1 // pred_region
      %51 = vsyncadd [#allocation5], 0
      %s52 = sshll.u32 %s8, 4
      %s53 = int_to_ptr.hbm [resolvable:$true] %s52
      %s54 = sshll.u32 [#allocation4], 4
      %s55 = int_to_ptr.vmem [resolvable:$true] %s54
      %60 = dma.hbm_to_vmem [thread:$0]  %s53, 256, %s55, [#allocation5], 128, 128, 8
    $region37: #{vae_forward_once.1} parent=1 // pred_fallthru
      _
    // Predicated region
    $region38: #{vae_forward_once.1} parent=1 // pred_check
      _
    $region39: #{vae_forward_once.1} parent=1 // pred_check_branch
      %62 = sbr.rel (0) target = $region41
    $region40: #{vae_forward_once.1} parent=1 // pred_region
      %64 = vsyncadd [#allocation5], 0
      %s66 = sshll.u32 %s9, 4
      %s67 = int_to_ptr.hbm [resolvable:$true] %s66
      %s68 = sshll.u32 [#allocation6], 4
      %s69 = int_to_ptr.vmem [resolvable:$true] %s68
      %71 = dma.hbm_to_vmem [thread:$0]  %s67, 16, %s69, [#allocation5]
    $region41: #{vae_forward_once.1} parent=1 // pred_fallthru
      _
    // Predicated region
    $region42: #{vae_forward_once.1} parent=1 // pred_check
      _
    $region43: #{vae_forward_once.1} parent=1 // pred_check_branch
      %73 = sbr.rel (0) target = $region45
    $region44: #{vae_forward_once.1} parent=1 // pred_region
      %75 = vsyncadd [#allocation8], 0
      %s76 = sshll.u32 %s10, 4
      %s77 = int_to_ptr.hbm [resolvable:$true] %s76
      %s78 = sshll.u32 [#allocation7], 4
      %s79 = int_to_ptr.vmem [resolvable:$true] %s78
      %84 = dma.hbm_to_vmem [thread:$0]  %s77, 384, %s79, [#allocation8], 128, 128, 8
    $region45: #{vae_forward_once.1} parent=1 // pred_fallthru
      _
    // Predicated region
    $region46: #{vae_forward_once.1} parent=1 // pred_check
      _
    $region47: #{vae_forward_once.1} parent=1 // pred_check_branch
      %86 = sbr.rel (0) target = $region49
    $region48: #{vae_forward_once.1} parent=1 // pred_region
      %88 = vsyncadd [#allocation8], 0
      %s90 = sshll.u32 %s11, 4
      %s91 = int_to_ptr.hbm [resolvable:$true] %s90
      %s92 = sshll.u32 [#allocation9], 4
      %s93 = int_to_ptr.vmem [resolvable:$true] %s92
      %95 = dma.hbm_to_vmem [thread:$0]  %s91, 16, %s93, [#allocation8]
    $region49: #{vae_forward_once.1} parent=1 // pred_fallthru
      _
    // Predicated region
    $region50: #{vae_forward_once.1} parent=1 // pred_check
      _
    $region51: #{vae_forward_once.1} parent=1 // pred_check_branch
      %97 = sbr.rel (0) target = $region53
    $region52: #{vae_forward_once.1} parent=1 // pred_region
      %99 = vsyncadd [#allocation11], 0
      %s100 = sshll.u32 %s12, 4
      %s101 = int_to_ptr.hbm [resolvable:$true] %s100
      %s102 = sshll.u32 [#allocation10], 4
      %s103 = int_to_ptr.vmem [resolvable:$true] %s102
      %108 = dma.hbm_to_vmem [thread:$0]  %s101, 384, %s103, [#allocation11], 128, 128, 8
    $region53: #{vae_forward_once.1} parent=1 // pred_fallthru
      _
    // Predicated region
    $region54: #{vae_forward_once.1} parent=1 // pred_check
      _
    $region55: #{vae_forward_once.1} parent=1 // pred_check_branch
      %110 = sbr.rel (0) target = $region57
    $region56: #{vae_forward_once.1} parent=1 // pred_region
      _
    $region57: #{vae_forward_once.1} parent=1 // pred_fallthru
      _
    // Predicated region
    $region58: #{vae_forward_once.1} parent=1 // pred_check
      _
    $region59: #{vae_forward_once.1} parent=1 // pred_check_branch
      %112 = sbr.rel (0) target = $region61
    $region60: #{vae_forward_once.1} parent=1 // pred_region
      %114 = dma.done [#allocation3], 128
    $region61: #{vae_forward_once.1} parent=1 // pred_fallthru
      _
    // Predicated region
    $region62: #{vae_forward_once.1} parent=1 // pred_check
      _
    $region63: #{vae_forward_once.1} parent=1 // pred_check_branch
      %116 = sbr.rel (0) target = $region65
    $region64: #{vae_forward_once.1} parent=1 // pred_region
      %118 = dma.done [#allocation5], 256
    $region65: #{vae_forward_once.1} parent=1 // pred_fallthru
      _
    // Predicated region
    $region66: #{vae_forward_once.1} parent=1 // pred_check
      _
    $region67: #{vae_forward_once.1} parent=1 // pred_check_branch
      %120 = sbr.rel (0) target = $region69
    $region68: #{vae_forward_once.1} parent=1 // pred_region
      %122 = dma.done [#allocation5], 16
    $region69: #{vae_forward_once.1} parent=1 // pred_fallthru
      _
    // Predicated region
    $region70: #{vae_forward_once.1} parent=1 // pred_check
      _
    $region71: #{vae_forward_once.1} parent=1 // pred_check_branch
      %124 = sbr.rel (0) target = $region73
    $region72: #{vae_forward_once.1} parent=1 // pred_region
      %126 = dma.done [#allocation8], 384
    $region73: #{vae_forward_once.1} parent=1 // pred_fallthru
      _
    // Predicated region
    $region74: #{vae_forward_once.1} parent=1 // pred_check
      _
    $region75: #{vae_forward_once.1} parent=1 // pred_check_branch
      %128 = sbr.rel (0) target = $region77
    $region76: #{vae_forward_once.1} parent=1 // pred_region
      %130 = dma.done [#allocation8], 16
    $region77: #{vae_forward_once.1} parent=1 // pred_fallthru
      _
    // Predicated region
    $region78: #{vae_forward_once.1} parent=1 // pred_check
      _
    $region79: #{vae_forward_once.1} parent=1 // pred_check_branch
      %132 = sbr.rel (0) target = $region81
    $region80: #{vae_forward_once.1} parent=1 // pred_region
      %134 = dma.done [#allocation11], 384
    $region81: #{vae_forward_once.1} parent=1 // pred_fallthru
      _
    %v135 = vld [vmem:[%s0] sm:$0xff]
    %v136 = vld [vmem:[%s2] sm:$0xff]
    %v137 = vld [vmem:[%s2 + $0x8] sm:$0xff]
    %v138 = vld [vmem:[%s2 + $0x10] sm:$0xff]
    %v139 = vld [vmem:[%s2 + $0x18] sm:$0xff]
    %v140 = vld [vmem:[%s3] sm:$0x1]
    %v142 = vperm.slane %v140, 0
    %vm144 = vcmask 261120
    %v146 = vsel %vm144, %v135, 0
    %148 = vmatpush.msra.mxu0 0.0
    %149 = vmatpush.msra.mxu0 0.0
    %150 = vmatpush.msra.mxu0 0.0
    %151 = vmatpush.msra.mxu0 0.0
    %152 = vmatpush.msra.mxu0 0.0
    %153 = vmatpush.msra.mxu0 0.0
    %154 = vmatpush.msra.mxu0 0.0
    %155 = vmatpush.msra.mxu0 0.0
    %156 = vmatpush.msra.mxu0 0.0
    %157 = vmatpush.msra.mxu0 0.0
    %158 = vmatpush.msra.mxu0 0.0
    %159 = vmatpush.msra.mxu0 0.0
    %160 = vmatpush.msra.mxu0 %v139
    %161 = vmatpush.msra.mxu0 %v138
    %162 = vmatpush.msra.mxu0 %v137
    %163 = vmatpush.msra.mxu0 %v136
    %164 = vmatmul.f32.gmra.mxu0 %v146
    %v165 = vpop.f32.mrf.mxu0
    %v166 = vadd.f32 %v142, %v165
    %167 = vdwg.mxu0
    %vm168 = vcmp.gt.f32.partialorder %v166, 0.0
    %v169 = vmin.f32 %v166, 0.0
    %v170 = vmul.f32 %v169, 1.442695
    %v171 = vpow.pop %v170
    %v172 = vsub.f32 %v171, 1.0
    %v173 = vsel %vm168, %v166, %v172
    %v174 = vld [vmem:[%s4] sm:$0xff]
    %v175 = vld [vmem:[%s4 + $0x8] sm:$0xff]
    %v176 = vld [vmem:[%s4 + $0x10] sm:$0xf]
    %v177 = vld [vmem:[%s5] sm:$0x1]
    %v179 = vperm.slane %v177, 0
    %vm181 = vcmask 162816
    %v183 = vsel %vm181, %v173, 0
    %vm185 = vcmask 1043456
    %v187 = vsel %vm185, %v176, 0
    %189 = vmatpush.msra.mxu0 0.0
    %190 = vmatpush.msra.mxu0 0.0
    %191 = vmatpush.msra.mxu0 0.0
    %192 = vmatpush.msra.mxu0 0.0
    %193 = vmatpush.msra.mxu0 0.0
    %194 = vmatpush.msra.mxu0 0.0
    %195 = vmatpush.msra.mxu0 0.0
    %196 = vmatpush.msra.mxu0 0.0
    %197 = vmatpush.msra.mxu0 0.0
    %198 = vmatpush.msra.mxu0 0.0
    %199 = vmatpush.msra.mxu0 0.0
    %200 = vmatpush.msra.mxu0 0.0
    %201 = vmatpush.msra.mxu0 0.0
    %202 = vmatpush.msra.mxu0 %v187
    %203 = vmatpush.msra.mxu0 %v175
    %204 = vmatpush.msra.mxu0 %v174
    %205 = vmatmul.f32.gmra.mxu0 %v183
    %v206 = vpop.f32.mrf.mxu0
    %v207 = vadd.f32 %v179, %v206
    %208 = vdwg.mxu0
    %vm209 = vcmp.gt.f32.partialorder %v207, 0.0
    %v210 = vmin.f32 %v207, 0.0
    %v211 = vmul.f32 %v210, 1.442695
    %v212 = vpow.pop %v211
    %v213 = vsub.f32 %v212, 1.0
    %v214 = vsel %vm209, %v207, %v213
    %v215 = vld [vmem:[%s6] sm:$0xff]
    %v216 = vld [vmem:[%s6 + $0x8] sm:$0xff]
    %v217 = vld [vmem:[%s6 + $0x10] sm:$0xf]
    %v218 = vld [vmem:[%s7] sm:$0x1]
    %v220 = vperm.slane %v218, 0
    %v223 = vsel %vm181, %v214, 0
    %v226 = vsel %vm185, %v217, 0
    %228 = vmatpush.msra.mxu0 0.0
    %229 = vmatpush.msra.mxu0 0.0
    %230 = vmatpush.msra.mxu0 0.0
    %231 = vmatpush.msra.mxu0 0.0
    %232 = vmatpush.msra.mxu0 0.0
    %233 = vmatpush.msra.mxu0 0.0
    %234 = vmatpush.msra.mxu0 0.0
    %235 = vmatpush.msra.mxu0 0.0
    %236 = vmatpush.msra.mxu0 0.0
    %237 = vmatpush.msra.mxu0 0.0
    %238 = vmatpush.msra.mxu0 0.0
    %239 = vmatpush.msra.mxu0 0.0
    %240 = vmatpush.msra.mxu0 0.0
    %241 = vmatpush.msra.mxu0 %v226
    %242 = vmatpush.msra.mxu0 %v216
    %243 = vmatpush.msra.mxu0 %v215
    %244 = vmatmul.f32.gmra.mxu0 %v223
    %v245 = vpop.f32.mrf.mxu0
    %v246 = vadd.f32 %v220, %v245
    %247 = vdwg.mxu0
    %v248 = vmul.f32 %v246, 0.5
    %v249 = vmul.f32 %v248, 1.442695
    %v250 = vpow.pop %v249
    %v251 = vld [vmem:[#allocation2] sm:$0xff]
    %253 = vrot.lane.b32.xlu0 %v250, 118
    %v254 = vpop.permute.xlu0 %253
    %v256 = vmul.f32 %v251, %v254
    %v257 = vadd.f32 %v246, %v256
    %v258 = vld [vmem:[#allocation4] sm:$0xff]
    %v259 = vld [vmem:[#allocation4 + $0x8] sm:$0x3]
    %v260 = vld [vmem:[#allocation6] sm:$0x1]
    %v262 = vperm.slane %v260, 0
    %vm264 = vcmask 80896
    %v266 = vsel %vm264, %v257, 0
    %vm268 = vcmask 1041408
    %v270 = vsel %vm268, %v259, 0
    %272 = vmatpush.msra.mxu0 0.0
    %273 = vmatpush.msra.mxu0 0.0
    %274 = vmatpush.msra.mxu0 0.0
    %275 = vmatpush.msra.mxu0 0.0
    %276 = vmatpush.msra.mxu0 0.0
    %277 = vmatpush.msra.mxu0 0.0
    %278 = vmatpush.msra.mxu0 0.0
    %279 = vmatpush.msra.mxu0 0.0
    %280 = vmatpush.msra.mxu0 0.0
    %281 = vmatpush.msra.mxu0 0.0
    %282 = vmatpush.msra.mxu0 0.0
    %283 = vmatpush.msra.mxu0 0.0
    %284 = vmatpush.msra.mxu0 0.0
    %285 = vmatpush.msra.mxu0 0.0
    %286 = vmatpush.msra.mxu0 %v270
    %287 = vmatpush.msra.mxu0 %v258
    %288 = vmatmul.f32.gmra.mxu0 %v266
    %v289 = vpop.f32.mrf.mxu0
    %v290 = vadd.f32 %v262, %v289
    %291 = vdwg.mxu0
    %vm292 = vcmp.gt.f32.partialorder %v290, 0.0
    %v293 = vmin.f32 %v290, 0.0
    %v294 = vmul.f32 %v293, 1.442695
    %v295 = vpow.pop %v294
    %v296 = vsub.f32 %v295, 1.0
    %v297 = vsel %vm292, %v290, %v296
    %v298 = vld [vmem:[#allocation7] sm:$0xff]
    %v299 = vld [vmem:[#allocation7 + $0x8] sm:$0xff]
    %v300 = vld [vmem:[#allocation7 + $0x10] sm:$0xf]
    %v301 = vld [vmem:[#allocation9] sm:$0x1]
    %v303 = vperm.slane %v301, 0
    %v306 = vsel %vm181, %v297, 0
    %v309 = vsel %vm185, %v300, 0
    %311 = vmatpush.msra.mxu0 0.0
    %312 = vmatpush.msra.mxu0 0.0
    %313 = vmatpush.msra.mxu0 0.0
    %314 = vmatpush.msra.mxu0 0.0
    %315 = vmatpush.msra.mxu0 0.0
    %316 = vmatpush.msra.mxu0 0.0
    %317 = vmatpush.msra.mxu0 0.0
    %318 = vmatpush.msra.mxu0 0.0
    %319 = vmatpush.msra.mxu0 0.0
    %320 = vmatpush.msra.mxu0 0.0
    %321 = vmatpush.msra.mxu0 0.0
    %322 = vmatpush.msra.mxu0 0.0
    %323 = vmatpush.msra.mxu0 0.0
    %324 = vmatpush.msra.mxu0 %v309
    %325 = vmatpush.msra.mxu0 %v299
    %326 = vmatpush.msra.mxu0 %v298
    %327 = vmatmul.f32.gmra.mxu0 %v306
    %v328 = vpop.f32.mrf.mxu0
    %v329 = vadd.f32 %v303, %v328
    %330 = vdwg.mxu0
    %vm331 = vcmp.gt.f32.partialorder %v329, 0.0
    %v332 = vmin.f32 %v329, 0.0
    %v333 = vmul.f32 %v332, 1.442695
    %v334 = vpow.pop %v333
    %v335 = vsub.f32 %v334, 1.0
    %v336 = vsel %vm331, %v329, %v335
    %v337 = vld [vmem:[#allocation10] sm:$0xff]
    %v338 = vld [vmem:[#allocation10 + $0x8] sm:$0xff]
    %v339 = vld [vmem:[#allocation10 + $0x10] sm:$0xf]
    %v340 = vld [vmem:[%s13] sm:$0x1]
    %v342 = vperm.slane %v340, 0
    %v345 = vsel %vm181, %v336, 0
    %v348 = vsel %vm185, %v339, 0
    %350 = vmatpush.msra.mxu0 0.0
    %351 = vmatpush.msra.mxu0 0.0
    %352 = vmatpush.msra.mxu0 0.0
    %353 = vmatpush.msra.mxu0 0.0
    %354 = vmatpush.msra.mxu0 0.0
    %355 = vmatpush.msra.mxu0 0.0
    %356 = vmatpush.msra.mxu0 0.0
    %357 = vmatpush.msra.mxu0 0.0
    %358 = vmatpush.msra.mxu0 0.0
    %359 = vmatpush.msra.mxu0 0.0
    %360 = vmatpush.msra.mxu0 0.0
    %361 = vmatpush.msra.mxu0 0.0
    %362 = vmatpush.msra.mxu0 0.0
    %363 = vmatpush.msra.mxu0 %v348
    %364 = vmatpush.msra.mxu0 %v338
    %365 = vmatpush.msra.mxu0 %v337
    %366 = vmatmul.f32.gmra.mxu0 %v345
    %v367 = vpop.f32.mrf.mxu0
    %v368 = vadd.f32 %v342, %v367
    %369 = vdwg.mxu0
    %v370 = vmax.f32 %v368, 0.0
    %372 = vrot.lane.b32.xlu0 %v246, 32
    %v373 = vpop.permute.xlu0 %372
    %v375 = vsel %vm144, %v370, %v373
    %vm376 = vcmask 424960
    %v377 = vsel %vm376, %v375, 0.0
    %378 = vst [vmem:[%s14] sm:$0xff] %v377
    // Predicated region
    $region82: #{vae_forward_once.1} parent=1 // pred_check
      _
    $region83: #{vae_forward_once.1} parent=1 // pred_check_branch
      %380 = sbr.rel (0) target = $region85
    $region84: #{vae_forward_once.1} parent=1 // pred_region
      _
    $region85: #{vae_forward_once.1} parent=1 // pred_fallthru
      _
    // Predicated region
    $region86: #{vae_forward_once.1} parent=1 // pred_check
      _
    $region87: #{vae_forward_once.1} parent=1 // pred_check_branch
      %382 = sbr.rel (0) target = $region89
    $region88: #{vae_forward_once.1} parent=1 // pred_region
      _
    $region89: #{vae_forward_once.1} parent=1 // pred_fallthru
      _
    %383 = vsyncpa [#allocation3], 1
    %384 = vsyncpa [#allocation5], 1
    %385 = vsyncpa [#allocation8], 1
    %386 = vsyncpa [#allocation11], 1

</llo_original>
